<compile_context>
chip_gen: v7x
topology: tpu7x:2x2x1
jax: 0.10.0
libtpu: 0.0.40
codegen_flags: <defaults>
</compile_context>

<pallas_src>
import functools

import jax
import jax.numpy as jnp
from jax import lax
from jax.experimental import pallas as pl
from jax.experimental.pallas import tpu as pltpu

LANE = 128
SUBLANE = 8
ROW_ALIGN = 32          # covers f32 (8), bf16 (16) and int8/fp8 (32) packing
MAX_TILE_ROWS = 4096    # 2 MiB f32 / input block; fits every generation's default VMEM


def _cdiv(a, b):
    return -(-a // b)


def _round_up(a, b):
    return _cdiv(a, b) * b


def _dice_bce_kernel(x_ref, t_ref, out_ref, *, nb, nbc, tile_rows,
                     valid_in_last, needs_mask, exact):
    c = pl.program_id(0)        # partition ("parallel" -> one per TensorCore on v7x)
    i = pl.program_id(1)        # reduction step within partition ("arbitrary")
    b = c * nbc + i             # global block index

    # Zero this partition's accumulator (the resident output block) at the
    # start of its reduction axis.
    @pl.when(i == 0)
    def _():
        out_ref[...] = jnp.zeros_like(out_ref)

    def accumulate(masked):
        x = x_ref[...].astype(jnp.float32)   # in-kernel cast: stream native dtype
        t = t_ref[...].astype(jnp.float32)

        if masked:
            row_ids = lax.broadcasted_iota(jnp.int32, (tile_rows, LANE), 0)
            lane_ids = lax.broadcasted_iota(jnp.int32, (tile_rows, LANE), 1)
            lidx = row_ids * LANE + lane_ids          # index within this block (<2^20)
            mask = lidx < valid_in_last
            mask_f = mask.astype(jnp.float32)
            # Zero BEFORE the math so undefined ragged-block data (possibly NaN)
            # can never leak into the sums.
            x = jnp.where(mask, x, 0.0)
            t = jnp.where(mask, t, 0.0)

        # Shared-exp stable sigmoid / BCE-with-logits.
        e = jnp.exp(-jnp.abs(x))
        log_sig = jnp.minimum(x, 0.0) - jnp.log1p(e)           # log(sigmoid(x))
        p = jnp.exp(log_sig)                                    # sigmoid(x) via EUP
        # torch.nn.functional.binary_cross_entropy clamps log terms at -100.
        log_p = jnp.maximum(log_sig, jnp.float32(-100.0))       # log(p)
        log_1mp = jnp.maximum(log_sig - x, jnp.float32(-100.0)) # log(1 - p)
        bce_elem = -(t * (log_p - log_1mp) + log_1mp)

        if masked:
            p = p * mask_f
            bce_elem = bce_elem * mask_f
            # t was already zeroed by the where() above.

        n_groups = tile_rows // SUBLANE

        def partial_sum(v):
            # Vector-wise partial reduction (pure VPU adds); keep (8,128) lanes
            # live.  The expensive cross-lane reduction happens in the wrapper.
            return jnp.sum(v.reshape(n_groups, SUBLANE, LANE), axis=0)

        out_ref[0, 0] += partial_sum(p * t)       # intersection
        out_ref[0, 1] += partial_sum(p)           # sum(p)
        out_ref[0, 2] += partial_sum(t)           # sum(t)
        out_ref[0, 3] += partial_sum(bce_elem)    # BCE sum

    if needs_mask:
        # Only the globally-last block can contain padding / ragged rows.
        @pl.when(b < nb - 1)
        def _():
            accumulate(masked=False)

        @pl.when(b == nb - 1)
        def _():
            accumulate(masked=True)
    elif exact:
        accumulate(masked=False)
    else:
        # Phantom blocks (b >= nb) of the second partition contribute nothing.
        @pl.when(b < nb)
        def _():
            accumulate(masked=False)


def dice_bce_loss(outputs, target, dice_weight, smooth=1e-5, *,
                  max_tile_rows=MAX_TILE_ROWS):
    """outputs: raw logits (any shape/dtype); target: same shape, values in [0,1]."""
    total = outputs.size

    x_flat = outputs.reshape(-1)
    t_flat = target.reshape(-1)

    rows = _cdiv(total, LANE)
    lane_pad = rows * LANE - total
    if lane_pad:
        # TODO(synk): fold the <128-element tail with a tiny jnp epilogue to avoid
        # this whole-array pad copy (only hit when numel % 128 != 0).
        x_flat = jnp.pad(x_flat, (0, lane_pad))
        t_flat = jnp.pad(t_flat, (0, lane_pad))
    x2 = x_flat.reshape(rows, LANE)     # copy-free reshape; native dtype streams in
    t2 = t_flat.reshape(rows, LANE)

    tile_rows = min(_round_up(max_tile_rows, ROW_ALIGN), _round_up(rows, ROW_ALIGN))
    nb = _cdiv(rows, tile_rows)                      # total blocks
    num_parts = 2 if nb >= 2 else 1                  # 2-TC split (helps on v7x)
    nbc = _cdiv(nb, num_parts)                       # blocks per partition
    block_elems = tile_rows * LANE
    valid_in_last = total - (nb - 1) * block_elems   # valid elems in last block
    needs_mask = valid_in_last != block_elems
    exact = (num_parts * nbc == nb)

    kernel = functools.partial(
        _dice_bce_kernel,
        nb=nb, nbc=nbc, tile_rows=tile_rows,
        valid_in_last=valid_in_last, needs_mask=needs_mask, exact=exact)

    def in_map(c, i):
        # Clamp phantom block indices (second partition, odd nb) to a valid block;
        # the kernel skips their contribution.
        return (jnp.minimum(c * nbc + i, nb - 1), 0)

    partials = pl.pallas_call(
        kernel,
        out_shape=jax.ShapeDtypeStruct((num_parts, 4, SUBLANE, LANE), jnp.float32),
        grid_spec=pltpu.PrefetchScalarGridSpec(
            num_scalar_prefetch=0,
            grid=(num_parts, nbc),
            in_specs=[
                pl.BlockSpec((tile_rows, LANE), in_map),
                pl.BlockSpec((tile_rows, LANE), in_map),
            ],
            out_specs=pl.BlockSpec((1, 4, SUBLANE, LANE),
                                   lambda c, i: (c, 0, 0, 0)),
        ),
        compiler_params=pltpu.CompilerParams(
            dimension_semantics=("parallel", "arbitrary"),
            vmem_limit_bytes=32 * 1024 * 1024,
        ),
    )(x2, t2)

    # Tiny final combine (a few thousand floats) in the wrapper.
    sums = jnp.sum(partials, axis=(0, 2, 3))         # (4,)
    intersection = sums[0]
    sum_p = sums[1]
    sum_t = sums[2]
    bce_sum = sums[3]

    n = jnp.float32(total)
    s = jnp.float32(smooth)
    dice_coefficient = (2.0 * intersection + s) / (sum_p + sum_t + s)
    dice_loss = 1.0 - dice_coefficient
    bce_mean = bce_sum / n
    w = jnp.asarray(dice_weight, jnp.float32)
    return (1.0 - w) * bce_mean + w * dice_loss


def _reference(outputs, target, dice_weight, smooth=1e-5):
    p = jax.nn.sigmoid(outputs.astype(jnp.float32)).reshape(-1)
    t = target.astype(jnp.float32).reshape(-1)
    intersection = jnp.sum(p * t)
    dice_coefficient = (2.0 * intersection + smooth) / (jnp.sum(p) + jnp.sum(t) + smooth)
    dice_loss = 1.0 - dice_coefficient
    bce = jnp.mean(-(t * jnp.log(p) + (1.0 - t) * jnp.log1p(-p)))
    return (1.0 - dice_weight) * bce + dice_weight * dice_loss


if __name__ == "__main__":
    key = jax.random.PRNGKey(0)
    k1, k2, k3, k4 = jax.random.split(key, 4)

    dice_weight = 0.5   # "parameter" from __init__, set deterministically

    # 1) NCHW case (2,4,16,16): numel = 2048, single ragged block.
    B, C, H, W = 2, 4, 16, 16
    logits = jax.random.normal(k1, (B, C, H, W), dtype=jnp.float32)
    target = (jax.random.uniform(k2, (B, C, H, W)) > 0.5).astype(jnp.float32)
    loss = jax.block_until_ready(dice_bce_loss(logits, target, dice_weight))
    ref = _reference(logits, target, dice_weight)
    assert jnp.allclose(loss, ref, atol=1e-5, rtol=1e-5), (loss, ref)

    # 2) numel not a multiple of 128 (exercises the lane-pad + mask path).
    n_odd = 3 * 7 * 11 * 5   # 1155
    logits_odd = jax.random.normal(k1, (n_odd,), dtype=jnp.float32)
    target_odd = (jax.random.uniform(k2, (n_odd,)) > 0.5).astype(jnp.float32)
    loss_odd = jax.block_until_ready(dice_bce_loss(logits_odd, target_odd, dice_weight))
    ref_odd = _reference(logits_odd, target_odd, dice_weight)
    assert jnp.allclose(loss_odd, ref_odd, atol=1e-5, rtol=1e-5), (loss_odd, ref_odd)

    # 3) Multi-block / two-partition path with a phantom block and ragged last
    #    block (small tile forced to exercise the full grid machinery).
    logits_mb = jax.random.normal(k3, (3, 100, 128), dtype=jnp.float32)
    target_mb = (jax.random.uniform(k4, (3, 100, 128)) > 0.5).astype(jnp.float32)
    loss_mb = jax.block_until_ready(
        dice_bce_loss(logits_mb, target_mb, dice_weight, max_tile_rows=64))
    ref_mb = _reference(logits_mb, target_mb, dice_weight)
    assert jnp.allclose(loss_mb, ref_mb, atol=1e-5, rtol=1e-5), (loss_mb, ref_mb)

    # 4) Native bf16 streaming (in-kernel upcast).
    logits_bf = logits.astype(jnp.bfloat16)
    target_bf = target.astype(jnp.bfloat16)
    loss_bf = jax.block_until_ready(dice_bce_loss(logits_bf, target_bf, dice_weight))
    ref_bf = _reference(logits_bf, target_bf, dice_weight)
    assert jnp.allclose(loss_bf, ref_bf, atol=1e-5, rtol=1e-5), (loss_bf, ref_bf)

    print("KERNEL_OK")
</pallas_src>

<mosaic_0001>
module attributes {stable_mosaic.version = 11 : i64} {
  func.func @_dice_bce_kernel(%arg0: i32, %arg1: i32, %arg2: memref<32x128xf32, #tpu.memory_space<vmem>>, %arg3: memref<32x128xf32, #tpu.memory_space<vmem>>, %arg4: memref<1x4x8x128xf32, #tpu.memory_space<vmem>>) attributes {dimension_semantics = [#tpu.dimension_semantics<parallel>, #tpu.dimension_semantics<arbitrary>], iteration_bounds = array<i64: 1, 1>, scalar_prefetch = 0 : i64, scratch_operands = 0 : i64, tpu.core_type = #tpu.core_type<tc>, window_params = [{transform_indices = @transform_0, window_bounds = array<i64: 32, 128>}, {transform_indices = @transform_1, window_bounds = array<i64: 32, 128>}, {transform_indices = @transform_2, window_bounds = array<i64: 1, 4, 8, 128>}]} {
    %c1_i32 = arith.constant 1 : i32
    %0 = arith.muli %arg0, %c1_i32 : i32
    %1 = arith.addi %0, %arg1 : i32
    %c0_i32 = arith.constant 0 : i32
    %2 = arith.cmpi eq, %arg1, %c0_i32 : i32
    %3 = arith.extui %2 : i1 to i32
    %c0_i32_0 = arith.constant 0 : i32
    %4 = arith.cmpi ne, %3, %c0_i32_0 : i32
    scf.if %4 {
      %cst = arith.constant 0.000000e+00 : f32
      %11 = vector.broadcast %cst : f32 to vector<1x4x8x128xf32>
      %c0 = arith.constant 0 : index
      %c0_5 = arith.constant 0 : index
      %c0_6 = arith.constant 0 : index
      %c0_7 = arith.constant 0 : index
      %12 = vector.load %arg4[%c0, %c0_5, %c0_6, %c0_7] : memref<1x4x8x128xf32, #tpu.memory_space<vmem>>, vector<1x4x8x128xf32>
      tpu.vector_store %arg4[%c0, %c0_5, %c0_6, %c0_7], %11 {strides = array<i32>} : memref<1x4x8x128xf32, #tpu.memory_space<vmem>>, vector<1x4x8x128xf32>,
    } else {
    }
    %c0_i32_1 = arith.constant 0 : i32
    %5 = arith.cmpi slt, %1, %c0_i32_1 : i32
    %6 = arith.extui %5 : i1 to i32
    %c0_i32_2 = arith.constant 0 : i32
    %7 = arith.cmpi ne, %6, %c0_i32_2 : i32
    scf.if %7 {
      %c0 = arith.constant 0 : index
      %c0_5 = arith.constant 0 : index
      %11 = vector.load %arg2[%c0, %c0_5] : memref<32x128xf32, #tpu.memory_space<vmem>>, vector<32x128xf32>
      %c0_6 = arith.constant 0 : index
      %c0_7 = arith.constant 0 : index
      %12 = vector.load %arg3[%c0_6, %c0_7] : memref<32x128xf32, #tpu.memory_space<vmem>>, vector<32x128xf32>
      %13 = math.absf %11 : vector<32x128xf32>
      %cst = arith.constant 0.000000e+00 : f32
      %14 = vector.broadcast %cst : f32 to vector<32x128xf32>
      %15 = arith.subf %14, %13 : vector<32x128xf32>
      %16 = math.exp %15 : vector<32x128xf32>
      %cst_8 = arith.constant 0.000000e+00 : f32
      %17 = vector.broadcast %cst_8 : f32 to vector<32x128xf32>
      %18 = arith.minimumf %11, %17 : vector<32x128xf32>
      %19 = math.log1p %16 : vector<32x128xf32>
      %20 = arith.subf %18, %19 : vector<32x128xf32>
      %21 = math.exp %20 : vector<32x128xf32>
      %cst_9 = arith.constant -1.000000e+02 : f32
      %22 = vector.broadcast %cst_9 : f32 to vector<32x128xf32>
      %23 = arith.maximumf %20, %22 : vector<32x128xf32>
      %24 = arith.subf %20, %11 : vector<32x128xf32>
      %cst_10 = arith.constant -1.000000e+02 : f32
      %25 = vector.broadcast %cst_10 : f32 to vector<32x128xf32>
      %26 = arith.maximumf %24, %25 : vector<32x128xf32>
      %27 = arith.subf %23, %26 : vector<32x128xf32>
      %28 = arith.mulf %12, %27 : vector<32x128xf32>
      %29 = arith.addf %28, %26 : vector<32x128xf32>
      %cst_11 = arith.constant 0.000000e+00 : f32
      %30 = vector.broadcast %cst_11 : f32 to vector<32x128xf32>
      %31 = arith.subf %30, %29 : vector<32x128xf32>
      %c0_12 = arith.constant 0 : index
      %c0_13 = arith.constant 0 : index
      %c0_14 = arith.constant 0 : index
      %c0_15 = arith.constant 0 : index
      %32 = vector.load %arg4[%c0_12, %c0_13, %c0_14, %c0_15] : memref<1x4x8x128xf32, #tpu.memory_space<vmem>>, vector<1x1x8x128xf32>
      %33 = vector.shape_cast %32 : vector<1x1x8x128xf32> to vector<8x128xf32>
      %34 = arith.mulf %21, %12 : vector<32x128xf32>
      %35 = vector.shape_cast %34 : vector<32x128xf32> to vector<4x8x128xf32>
      %cst_16 = arith.constant dense<0.000000e+00> : vector<8x128xf32>
      %36 = vector.multi_reduction <add>, %35, %cst_16 [0] : vector<4x8x128xf32> to vector<8x128xf32>
      %37 = arith.addf %33, %36 : vector<8x128xf32>
      %c0_17 = arith.constant 0 : index
      %c0_18 = arith.constant 0 : index
      %c0_19 = arith.constant 0 : index
      %c0_20 = arith.constant 0 : index
      %38 = vector.load %arg4[%c0_17, %c0_18, %c0_19, %c0_20] : memref<1x4x8x128xf32, #tpu.memory_space<vmem>>, vector<1x1x8x128xf32>
      %39 = vector.shape_cast %38 : vector<1x1x8x128xf32> to vector<8x128xf32>
      %40 = vector.shape_cast %37 : vector<8x128xf32> to vector<1x1x8x128xf32>
      tpu.vector_store %arg4[%c0_17, %c0_18, %c0_19, %c0_20], %40 {strides = array<i32>} : memref<1x4x8x128xf32, #tpu.memory_space<vmem>>, vector<1x1x8x128xf32>,
      %c0_21 = arith.constant 0 : index
      %c1 = arith.constant 1 : index
      %c0_22 = arith.constant 0 : index
      %c0_23 = arith.constant 0 : index
      %41 = vector.load %arg4[%c0_21, %c1, %c0_22, %c0_23] : memref<1x4x8x128xf32, #tpu.memory_space<vmem>>, vector<1x1x8x128xf32>
      %42 = vector.shape_cast %41 : vector<1x1x8x128xf32> to vector<8x128xf32>
      %43 = vector.shape_cast %21 : vector<32x128xf32> to vector<4x8x128xf32>
      %cst_24 = arith.constant dense<0.000000e+00> : vector<8x128xf32>
      %44 = vector.multi_reduction <add>, %43, %cst_24 [0] : vector<4x8x128xf32> to vector<8x128xf32>
      %45 = arith.addf %42, %44 : vector<8x128xf32>
      %c0_25 = arith.constant 0 : index
      %c1_26 = arith.constant 1 : index
      %c0_27 = arith.constant 0 : index
      %c0_28 = arith.constant 0 : index
      %46 = vector.load %arg4[%c0_25, %c1_26, %c0_27, %c0_28] : memref<1x4x8x128xf32, #tpu.memory_space<vmem>>, vector<1x1x8x128xf32>
      %47 = vector.shape_cast %46 : vector<1x1x8x128xf32> to vector<8x128xf32>
      %48 = vector.shape_cast %45 : vector<8x128xf32> to vector<1x1x8x128xf32>
      tpu.vector_store %arg4[%c0_25, %c1_26, %c0_27, %c0_28], %48 {strides = array<i32>} : memref<1x4x8x128xf32, #tpu.memory_space<vmem>>, vector<1x1x8x128xf32>,
      %c0_29 = arith.constant 0 : index
      %c2 = arith.constant 2 : index
      %c0_30 = arith.constant 0 : index
      %c0_31 = arith.constant 0 : index
      %49 = vector.load %arg4[%c0_29, %c2, %c0_30, %c0_31] : memref<1x4x8x128xf32, #tpu.memory_space<vmem>>, vector<1x1x8x128xf32>
      %50 = vector.shape_cast %49 : vector<1x1x8x128xf32> to vector<8x128xf32>
      %51 = vector.shape_cast %12 : vector<32x128xf32> to vector<4x8x128xf32>
      %cst_32 = arith.constant dense<0.000000e+00> : vector<8x128xf32>
      %52 = vector.multi_reduction <add>, %51, %cst_32 [0] : vector<4x8x128xf32> to vector<8x128xf32>
      %53 = arith.addf %50, %52 : vector<8x128xf32>
      %c0_33 = arith.constant 0 : index
      %c2_34 = arith.constant 2 : index
      %c0_35 = arith.constant 0 : index
      %c0_36 = arith.constant 0 : index
      %54 = vector.load %arg4[%c0_33, %c2_34, %c0_35, %c0_36] : memref<1x4x8x128xf32, #tpu.memory_space<vmem>>, vector<1x1x8x128xf32>
      %55 = vector.shape_cast %54 : vector<1x1x8x128xf32> to vector<8x128xf32>
      %56 = vector.shape_cast %53 : vector<8x128xf32> to vector<1x1x8x128xf32>
      tpu.vector_store %arg4[%c0_33, %c2_34, %c0_35, %c0_36], %56 {strides = array<i32>} : memref<1x4x8x128xf32, #tpu.memory_space<vmem>>, vector<1x1x8x128xf32>,
      %c0_37 = arith.constant 0 : index
      %c3 = arith.constant 3 : index
      %c0_38 = arith.constant 0 : index
      %c0_39 = arith.constant 0 : index
      %57 = vector.load %arg4[%c0_37, %c3, %c0_38, %c0_39] : memref<1x4x8x128xf32, #tpu.memory_space<vmem>>, vector<1x1x8x128xf32>
      %58 = vector.shape_cast %57 : vector<1x1x8x128xf32> to vector<8x128xf32>
      %59 = vector.shape_cast %31 : vector<32x128xf32> to vector<4x8x128xf32>
      %cst_40 = arith.constant dense<0.000000e+00> : vector<8x128xf32>
      %60 = vector.multi_reduction <add>, %59, %cst_40 [0] : vector<4x8x128xf32> to vector<8x128xf32>
      %61 = arith.addf %58, %60 : vector<8x128xf32>
      %c0_41 = arith.constant 0 : index
      %c3_42 = arith.constant 3 : index
      %c0_43 = arith.constant 0 : index
      %c0_44 = arith.constant 0 : index
      %62 = vector.load %arg4[%c0_41, %c3_42, %c0_43, %c0_44] : memref<1x4x8x128xf32, #tpu.memory_space<vmem>>, vector<1x1x8x128xf32>
      %63 = vector.shape_cast %62 : vector<1x1x8x128xf32> to vector<8x128xf32>
      %64 = vector.shape_cast %61 : vector<8x128xf32> to vector<1x1x8x128xf32>
      tpu.vector_store %arg4[%c0_41, %c3_42, %c0_43, %c0_44], %64 {strides = array<i32>} : memref<1x4x8x128xf32, #tpu.memory_space<vmem>>, vector<1x1x8x128xf32>,
    } else {
    }
    %c0_i32_3 = arith.constant 0 : i32
    %8 = arith.cmpi eq, %1, %c0_i32_3 : i32
    %9 = arith.extui %8 : i1 to i32
    %c0_i32_4 = arith.constant 0 : i32
    %10 = arith.cmpi ne, %9, %c0_i32_4 : i32
    scf.if %10 {
      %c0 = arith.constant 0 : index
      %c0_5 = arith.constant 0 : index
      %11 = vector.load %arg2[%c0, %c0_5] : memref<32x128xf32, #tpu.memory_space<vmem>>, vector<32x128xf32>
      %c0_6 = arith.constant 0 : index
      %c0_7 = arith.constant 0 : index
      %12 = vector.load %arg3[%c0_6, %c0_7] : memref<32x128xf32, #tpu.memory_space<vmem>>, vector<32x128xf32>
      %13 = tpu.iota {dimensions = array<i32: 0>} : vector<32x128xi32>
      %14 = tpu.iota {dimensions = array<i32: 1>} : vector<32x128xi32>
      %c128_i32 = arith.constant 128 : i32
      %15 = vector.broadcast %c128_i32 : i32 to vector<32x128xi32>
      %16 = arith.muli %13, %15 : vector<32x128xi32>
      %17 = arith.addi %16, %14 : vector<32x128xi32>
      %c2048_i32 = arith.constant 2048 : i32
      %18 = vector.broadcast %c2048_i32 : i32 to vector<32x128xi32>
      %19 = arith.cmpi slt, %17, %18 : vector<32x128xi32>
      %20 = arith.extui %19 : vector<32x128xi1> to vector<32x128xi32>
      %21 = arith.sitofp %20 : vector<32x128xi32> to vector<32x128xf32>
      %cst = arith.constant 0.000000e+00 : f32
      %22 = vector.broadcast %cst : f32 to vector<32x128xf32>
      %23 = arith.select %19, %11, %22 : vector<32x128xi1>, vector<32x128xf32>
      %cst_8 = arith.constant 0.000000e+00 : f32
      %24 = vector.broadcast %cst_8 : f32 to vector<32x128xf32>
      %25 = arith.select %19, %12, %24 : vector<32x128xi1>, vector<32x128xf32>
      %26 = math.absf %23 : vector<32x128xf32>
      %cst_9 = arith.constant 0.000000e+00 : f32
      %27 = vector.broadcast %cst_9 : f32 to vector<32x128xf32>
      %28 = arith.subf %27, %26 : vector<32x128xf32>
      %29 = math.exp %28 : vector<32x128xf32>
      %cst_10 = arith.constant 0.000000e+00 : f32
      %30 = vector.broadcast %cst_10 : f32 to vector<32x128xf32>
      %31 = arith.minimumf %23, %30 : vector<32x128xf32>
      %32 = math.log1p %29 : vector<32x128xf32>
      %33 = arith.subf %31, %32 : vector<32x128xf32>
      %34 = math.exp %33 : vector<32x128xf32>
      %cst_11 = arith.constant -1.000000e+02 : f32
      %35 = vector.broadcast %cst_11 : f32 to vector<32x128xf32>
      %36 = arith.maximumf %33, %35 : vector<32x128xf32>
      %37 = arith.subf %33, %23 : vector<32x128xf32>
      %cst_12 = arith.constant -1.000000e+02 : f32
      %38 = vector.broadcast %cst_12 : f32 to vector<32x128xf32>
      %39 = arith.maximumf %37, %38 : vector<32x128xf32>
      %40 = arith.subf %36, %39 : vector<32x128xf32>
      %41 = arith.mulf %25, %40 : vector<32x128xf32>
      %42 = arith.addf %41, %39 : vector<32x128xf32>
      %cst_13 = arith.constant 0.000000e+00 : f32
      %43 = vector.broadcast %cst_13 : f32 to vector<32x128xf32>
      %44 = arith.subf %43, %42 : vector<32x128xf32>
      %45 = arith.mulf %34, %21 : vector<32x128xf32>
      %46 = arith.mulf %44, %21 : vector<32x128xf32>
      %c0_14 = arith.constant 0 : index
      %c0_15 = arith.constant 0 : index
      %c0_16 = arith.constant 0 : index
      %c0_17 = arith.constant 0 : index
      %47 = vector.load %arg4[%c0_14, %c0_15, %c0_16, %c0_17] : memref<1x4x8x128xf32, #tpu.memory_space<vmem>>, vector<1x1x8x128xf32>
      %48 = vector.shape_cast %47 : vector<1x1x8x128xf32> to vector<8x128xf32>
      %49 = arith.mulf %45, %25 : vector<32x128xf32>
      %50 = vector.shape_cast %49 : vector<32x128xf32> to vector<4x8x128xf32>
      %cst_18 = arith.constant dense<0.000000e+00> : vector<8x128xf32>
      %51 = vector.multi_reduction <add>, %50, %cst_18 [0] : vector<4x8x128xf32> to vector<8x128xf32>
      %52 = arith.addf %48, %51 : vector<8x128xf32>
      %c0_19 = arith.constant 0 : index
      %c0_20 = arith.constant 0 : index
      %c0_21 = arith.constant 0 : index
      %c0_22 = arith.constant 0 : index
      %53 = vector.load %arg4[%c0_19, %c0_20, %c0_21, %c0_22] : memref<1x4x8x128xf32, #tpu.memory_space<vmem>>, vector<1x1x8x128xf32>
      %54 = vector.shape_cast %53 : vector<1x1x8x128xf32> to vector<8x128xf32>
      %55 = vector.shape_cast %52 : vector<8x128xf32> to vector<1x1x8x128xf32>
      tpu.vector_store %arg4[%c0_19, %c0_20, %c0_21, %c0_22], %55 {strides = array<i32>} : memref<1x4x8x128xf32, #tpu.memory_space<vmem>>, vector<1x1x8x128xf32>,
      %c0_23 = arith.constant 0 : index
      %c1 = arith.constant 1 : index
      %c0_24 = arith.constant 0 : index
      %c0_25 = arith.constant 0 : index
      %56 = vector.load %arg4[%c0_23, %c1, %c0_24, %c0_25] : memref<1x4x8x128xf32, #tpu.memory_space<vmem>>, vector<1x1x8x128xf32>
      %57 = vector.shape_cast %56 : vector<1x1x8x128xf32> to vector<8x128xf32>
      %58 = vector.shape_cast %45 : vector<32x128xf32> to vector<4x8x128xf32>
      %cst_26 = arith.constant dense<0.000000e+00> : vector<8x128xf32>
      %59 = vector.multi_reduction <add>, %58, %cst_26 [0] : vector<4x8x128xf32> to vector<8x128xf32>
      %60 = arith.addf %57, %59 : vector<8x128xf32>
      %c0_27 = arith.constant 0 : index
      %c1_28 = arith.constant 1 : index
      %c0_29 = arith.constant 0 : index
      %c0_30 = arith.constant 0 : index
      %61 = vector.load %arg4[%c0_27, %c1_28, %c0_29, %c0_30] : memref<1x4x8x128xf32, #tpu.memory_space<vmem>>, vector<1x1x8x128xf32>
      %62 = vector.shape_cast %61 : vector<1x1x8x128xf32> to vector<8x128xf32>
      %63 = vector.shape_cast %60 : vector<8x128xf32> to vector<1x1x8x128xf32>
      tpu.vector_store %arg4[%c0_27, %c1_28, %c0_29, %c0_30], %63 {strides = array<i32>} : memref<1x4x8x128xf32, #tpu.memory_space<vmem>>, vector<1x1x8x128xf32>,
      %c0_31 = arith.constant 0 : index
      %c2 = arith.constant 2 : index
      %c0_32 = arith.constant 0 : index
      %c0_33 = arith.constant 0 : index
      %64 = vector.load %arg4[%c0_31, %c2, %c0_32, %c0_33] : memref<1x4x8x128xf32, #tpu.memory_space<vmem>>, vector<1x1x8x128xf32>
      %65 = vector.shape_cast %64 : vector<1x1x8x128xf32> to vector<8x128xf32>
      %66 = vector.shape_cast %25 : vector<32x128xf32> to vector<4x8x128xf32>
      %cst_34 = arith.constant dense<0.000000e+00> : vector<8x128xf32>
      %67 = vector.multi_reduction <add>, %66, %cst_34 [0] : vector<4x8x128xf32> to vector<8x128xf32>
      %68 = arith.addf %65, %67 : vector<8x128xf32>
      %c0_35 = arith.constant 0 : index
      %c2_36 = arith.constant 2 : index
      %c0_37 = arith.constant 0 : index
      %c0_38 = arith.constant 0 : index
      %69 = vector.load %arg4[%c0_35, %c2_36, %c0_37, %c0_38] : memref<1x4x8x128xf32, #tpu.memory_space<vmem>>, vector<1x1x8x128xf32>
      %70 = vector.shape_cast %69 : vector<1x1x8x128xf32> to vector<8x128xf32>
      %71 = vector.shape_cast %68 : vector<8x128xf32> to vector<1x1x8x128xf32>
      tpu.vector_store %arg4[%c0_35, %c2_36, %c0_37, %c0_38], %71 {strides = array<i32>} : memref<1x4x8x128xf32, #tpu.memory_space<vmem>>, vector<1x1x8x128xf32>,
      %c0_39 = arith.constant 0 : index
      %c3 = arith.constant 3 : index
      %c0_40 = arith.constant 0 : index
      %c0_41 = arith.constant 0 : index
      %72 = vector.load %arg4[%c0_39, %c3, %c0_40, %c0_41] : memref<1x4x8x128xf32, #tpu.memory_space<vmem>>, vector<1x1x8x128xf32>
      %73 = vector.shape_cast %72 : vector<1x1x8x128xf32> to vector<8x128xf32>
      %74 = vector.shape_cast %46 : vector<32x128xf32> to vector<4x8x128xf32>
      %cst_42 = arith.constant dense<0.000000e+00> : vector<8x128xf32>
      %75 = vector.multi_reduction <add>, %74, %cst_42 [0] : vector<4x8x128xf32> to vector<8x128xf32>
      %76 = arith.addf %73, %75 : vector<8x128xf32>
      %c0_43 = arith.constant 0 : index
      %c3_44 = arith.constant 3 : index
      %c0_45 = arith.constant 0 : index
      %c0_46 = arith.constant 0 : index
      %77 = vector.load %arg4[%c0_43, %c3_44, %c0_45, %c0_46] : memref<1x4x8x128xf32, #tpu.memory_space<vmem>>, vector<1x1x8x128xf32>
      %78 = vector.shape_cast %77 : vector<1x1x8x128xf32> to vector<8x128xf32>
      %79 = vector.shape_cast %76 : vector<8x128xf32> to vector<1x1x8x128xf32>
      tpu.vector_store %arg4[%c0_43, %c3_44, %c0_45, %c0_46], %79 {strides = array<i32>} : memref<1x4x8x128xf32, #tpu.memory_space<vmem>>, vector<1x1x8x128xf32>,
    } else {
    }
    return
  }
  func.func @transform_0(%arg0: i32, %arg1: i32) -> (i32, i32) {
    %c1_i32 = arith.constant 1 : i32
    %0 = arith.muli %arg0, %c1_i32 : i32
    %1 = arith.addi %0, %arg1 : i32
    %c0_i32 = arith.constant 0 : i32
    %2 = arith.minsi %1, %c0_i32 : i32
    %c0_i32_0 = arith.constant 0 : i32
    %c0_i32_1 = arith.constant 0 : i32
    return %2, %c0_i32_0 : i32, i32
  }
  func.func @transform_1(%arg0: i32, %arg1: i32) -> (i32, i32) {
    %c1_i32 = arith.constant 1 : i32
    %0 = arith.muli %arg0, %c1_i32 : i32
    %1 = arith.addi %0, %arg1 : i32
    %c0_i32 = arith.constant 0 : i32
    %2 = arith.minsi %1, %c0_i32 : i32
    %c0_i32_0 = arith.constant 0 : i32
    %c0_i32_1 = arith.constant 0 : i32
    return %2, %c0_i32_0 : i32, i32
  }
  func.func @transform_2(%arg0: i32, %arg1: i32) -> (i32, i32, i32, i32) {
    %c0_i32 = arith.constant 0 : i32
    %c0_i32_0 = arith.constant 0 : i32
    %c0_i32_1 = arith.constant 0 : i32
    %c0_i32_2 = arith.constant 0 : i32
    return %arg0, %c0_i32, %c0_i32_0, %c0_i32_1 : i32, i32, i32, i32
  }
}

</mosaic_0001>

<llo_original>
// kernel: tpu_custom_call.1
$region0: #{tpu_custom_call.1}
  #allocation0 [shape = 'u32[]', space=smem, size = 0x4, offset = 0x4, fixed_abs, tag = 'smem constant byte address 0x4 - core index']
  #allocation1 [shape = 'u32[144,128]{1,0:T(1,128)}', space=vmem, size = 0x12000, scoped, tag = 'internal scratch']
  %s0 = inlined_call_operand.hbm [shape: f32[16,128], index: 0, kind: input, shape index: {}]
  %s1 = inlined_call_operand.hbm [shape: f32[16,128], index: 1, kind: input, shape index: {}]
  %s2 = inlined_call_operand.hbm [shape: f32[1,4,8,128], index: 2, kind: output, shape index: {}]
  %s3 = sld [smem:[#allocation0]]
  $region38: #{tpu_custom_call.1} parent=0
    _
  %s5 = ssub.s32 1, %s3
  %s6 = scalar_select 0, %s5, %s3
  $region1: #{tpu_custom_call.1} parent=0
    #allocation2 [shape = 'u8[16384]{0}', space=vmem, size = 0x4000, scoped, tag = 'input window, operand 0, single buffered']
    #allocation3 [shape = 's32[1]{0}', space=sflag, size = 0x4, scoped, tag = 'scoped memory for tpu_custom_call.1']
    #allocation4 [shape = 's32[1]{0}', space=sflag, size = 0x4, scoped, tag = 'scoped memory for tpu_custom_call.1']
    #allocation5 [shape = 'u8[16384]{0}', space=vmem, size = 0x4000, scoped, tag = 'input window, operand 1, single buffered']
    #allocation6 [shape = 's32[1]{0}', space=sflag, size = 0x4, scoped, tag = 'scoped memory for tpu_custom_call.1']
    #allocation7 [shape = 'u8[16384]{0}', space=vmem, size = 0x4000, scoped, tag = 'output window, operand 0, single buffered']
    %7 = vsyncpa [#allocation3], 0
    %8 = vsyncpa [#allocation6], 0
    %9 = vsyncpa [#allocation4], 0
    // Predicated region
    $region2: #{tpu_custom_call.1} parent=1 // pred_check
      _
    $region3: #{tpu_custom_call.1} parent=1 // pred_check_branch
      %11 = sbr.rel (0) target = $region5
    $region4: #{tpu_custom_call.1} parent=1 // pred_region
      %s12 = sadd.s32 0, 0
      %p13 = scmp.lt.s32.totalorder %s12, 0
      %s14 = scalar_select %p13, %s12, 0
      %s15 = smul.u32 4, %s14
      %s16 = ssub.s32 2, %s15
      %s17 = smul.u32 128, %s16
      %s19 = ssub.s32 512, %s17
      %20 = vsyncadd [#allocation3], %s19
      %p21 = scmp.ne.s32.totalorder 0, %s17
      %s22 = smul.addr %s15, 128
      %s23 = scalar_lea.hbm %s0, %s22
      %s24 = smul.u32 8, %s16
      %s25 = sshll.u32 [#allocation2], 4
      %s26 = int_to_ptr.vmem [resolvable:$true] %s25
      %s27 = sshll.u32 %s24, 4
      %31 = dma.hbm_to_vmem [thread:$0]  (%p21), %s23, %s27, %s26, [#allocation3], 128, 128, 8
    $region5: #{tpu_custom_call.1} parent=1 // pred_fallthru
      _
    // Predicated region
    $region6: #{tpu_custom_call.1} parent=1 // pred_check
      _
    $region7: #{tpu_custom_call.1} parent=1 // pred_check_branch
      %33 = sbr.rel (0) target = $region9
    $region8: #{tpu_custom_call.1} parent=1 // pred_region
      %s34 = sadd.s32 0, 0
      %p35 = scmp.lt.s32.totalorder %s34, 0
      %s36 = scalar_select %p35, %s34, 0
      %s37 = smul.u32 4, %s36
      %s38 = ssub.s32 2, %s37
      %s39 = smul.u32 128, %s38
      %s41 = ssub.s32 512, %s39
      %42 = vsyncadd [#allocation6], %s41
      %p43 = scmp.ne.s32.totalorder 0, %s39
      %s44 = smul.addr %s37, 128
      %s45 = scalar_lea.hbm %s1, %s44
      %s46 = smul.u32 8, %s38
      %s47 = sshll.u32 [#allocation5], 4
      %s48 = int_to_ptr.vmem [resolvable:$true] %s47
      %s49 = sshll.u32 %s46, 4
      %53 = dma.hbm_to_vmem [thread:$0]  (%p43), %s45, %s49, %s48, [#allocation6], 128, 128, 8
    $region9: #{tpu_custom_call.1} parent=1 // pred_fallthru
      _
    // Predicated region
    $region10: #{tpu_custom_call.1} parent=1 // pred_check
      _
    $region11: #{tpu_custom_call.1} parent=1 // pred_check_branch
      %55 = sbr.rel (0) target = $region13
    $region12: #{tpu_custom_call.1} parent=1 // pred_region
      %56 = dma.done [#allocation3], 512
    $region13: #{tpu_custom_call.1} parent=1 // pred_fallthru
      _
    // Predicated region
    $region14: #{tpu_custom_call.1} parent=1 // pred_check
      _
    $region15: #{tpu_custom_call.1} parent=1 // pred_check_branch
      %58 = sbr.rel (0) target = $region17
    $region16: #{tpu_custom_call.1} parent=1 // pred_region
      %59 = dma.done [#allocation6], 512
    $region17: #{tpu_custom_call.1} parent=1 // pred_fallthru
      _
    %s60 = sadd.s32 0, 0
    %p61 = scmp.lt.s32.totalorder %s60, 0
    %s62 = scalar_select %p61, %s60, 0
    %s63 = smul.u32 4, %s62
    %s64 = ssub.s32 2, %s63
    %s65 = smul.u32 128, %s64
    %s66 = sadd.s32 0, 0
    %p67 = scmp.lt.s32.totalorder %s66, 0
    %s68 = scalar_select %p67, %s66, 0
    %s69 = smul.u32 4, %s68
    %s70 = ssub.s32 2, %s69
    %s71 = smul.u32 128, %s70
    %s72 = sadd.s32 0, 0
    %p73 = scmp.eq.s32.totalorder 0, 0
    // Predicated region
    $region18: #{tpu_custom_call.1} parent=1 // pred_check
      %p74 = pneg %p73
    $region19: #{tpu_custom_call.1} parent=1 // pred_check_branch
      %76 = sbr.rel (%p74) target = $region21
    $region20: #{tpu_custom_call.1} parent=1 // pred_region
      %77 = vst [vmem:[#allocation7] sm:$0xff] 0.0
      %78 = vst [vmem:[#allocation7 + $0x8] sm:$0xff] 0.0
      %79 = vst [vmem:[#allocation7 + $0x10] sm:$0xff] 0.0
      %80 = vst [vmem:[#allocation7 + $0x18] sm:$0xff] 0.0
    $region21: #{tpu_custom_call.1} parent=1 // pred_fallthru
      _
    %p81 = scmp.lt.s32.totalorder %s72, 0
    // Predicated region
    $region22: #{tpu_custom_call.1} parent=1 // pred_check
      %p82 = pneg %p81
    $region23: #{tpu_custom_call.1} parent=1 // pred_check_branch
      %84 = sbr.rel (%p82) target = $region25
    $region24: #{tpu_custom_call.1} parent=1 // pred_region
      %v85 = vld [vmem:[#allocation2] sm:$0xff]
      %v86 = vld [vmem:[#allocation2 + $0x8] sm:$0xff]
      %v87 = vld [vmem:[#allocation2 + $0x10] sm:$0xff]
      %v88 = vld [vmem:[#allocation2 + $0x18] sm:$0xff]
      %v89 = vld [vmem:[#allocation5] sm:$0xff]
      %v90 = vld [vmem:[#allocation5 + $0x8] sm:$0xff]
      %v91 = vld [vmem:[#allocation5 + $0x10] sm:$0xff]
      %v92 = vld [vmem:[#allocation5 + $0x18] sm:$0xff]
      %v93 = vand.u32 2147483647, %v85
      %v94 = vand.u32 2147483647, %v86
      %v95 = vand.u32 2147483647, %v87
      %v96 = vand.u32 2147483647, %v88
      %v97 = vsub.f32 0.0, %v93
      %v98 = vsub.f32 0.0, %v94
      %v99 = vsub.f32 0.0, %v95
      %v100 = vsub.f32 0.0, %v96
      %v101 = vmul.f32 %v97, 1.442695
      %v102 = vpow.pop %v101
      %v103 = vmul.f32 %v98, 1.442695
      %v104 = vpow.pop %v103
      %v105 = vmul.f32 %v99, 1.442695
      %v106 = vpow.pop %v105
      %v107 = vmul.f32 %v100, 1.442695
      %v108 = vpow.pop %v107
      %v109 = vmin.f32 %v85, 0.0
      %v110 = vmin.f32 %v86, 0.0
      %v111 = vmin.f32 %v87, 0.0
      %v112 = vmin.f32 %v88, 0.0
      %v113 = vadd.f32 %v102, 1.0
      %v114 = vlog2.pop %v113
      %v115 = vmul.f32 %v114, 0.6931472
      %v116 = vmul.f32 -0.5, %v102
      %v117 = vadd.f32 %v116, 1.0
      %v118 = vmul.f32 %v117, %v102
      %v119 = vand.u32 2147483647, %v102
      %vm120 = vcmp.lt.f32.partialorder %v119, 0.0004427343
      %v121 = vsel %vm120, %v118, %v115
      %v122 = vadd.f32 %v104, 1.0
      %v123 = vlog2.pop %v122
      %v124 = vmul.f32 %v123, 0.6931472
      %v125 = vmul.f32 -0.5, %v104
      %v126 = vadd.f32 %v125, 1.0
      %v127 = vmul.f32 %v126, %v104
      %v128 = vand.u32 2147483647, %v104
      %vm129 = vcmp.lt.f32.partialorder %v128, 0.0004427343
      %v130 = vsel %vm129, %v127, %v124
      %v131 = vadd.f32 %v106, 1.0
      %v132 = vlog2.pop %v131
      %v133 = vmul.f32 %v132, 0.6931472
      %v134 = vmul.f32 -0.5, %v106
      %v135 = vadd.f32 %v134, 1.0
      %v136 = vmul.f32 %v135, %v106
      %v137 = vand.u32 2147483647, %v106
      %vm138 = vcmp.lt.f32.partialorder %v137, 0.0004427343
      %v139 = vsel %vm138, %v136, %v133
      %v140 = vadd.f32 %v108, 1.0
      %v141 = vlog2.pop %v140
      %v142 = vmul.f32 %v141, 0.6931472
      %v143 = vmul.f32 -0.5, %v108
      %v144 = vadd.f32 %v143, 1.0
      %v145 = vmul.f32 %v144, %v108
      %v146 = vand.u32 2147483647, %v108
      %vm147 = vcmp.lt.f32.partialorder %v146, 0.0004427343
      %v148 = vsel %vm147, %v145, %v142
      %v149 = vsub.f32 %v109, %v121
      %v150 = vsub.f32 %v110, %v130
      %v151 = vsub.f32 %v111, %v139
      %v152 = vsub.f32 %v112, %v148
      %v153 = vmul.f32 %v149, 1.442695
      %v154 = vpow.pop %v153
      %v155 = vmul.f32 %v150, 1.442695
      %v156 = vpow.pop %v155
      %v157 = vmul.f32 %v151, 1.442695
      %v158 = vpow.pop %v157
      %v159 = vmul.f32 %v152, 1.442695
      %v160 = vpow.pop %v159
      %v161 = vmax.f32 %v149, -100.0
      %v162 = vmax.f32 %v150, -100.0
      %v163 = vmax.f32 %v151, -100.0
      %v164 = vmax.f32 %v152, -100.0
      %v165 = vsub.f32 %v149, %v85
      %v166 = vsub.f32 %v150, %v86
      %v167 = vsub.f32 %v151, %v87
      %v168 = vsub.f32 %v152, %v88
      %v169 = vmax.f32 %v165, -100.0
      %v170 = vmax.f32 %v166, -100.0
      %v171 = vmax.f32 %v167, -100.0
      %v172 = vmax.f32 %v168, -100.0
      %v173 = vsub.f32 %v161, %v169
      %v174 = vsub.f32 %v162, %v170
      %v175 = vsub.f32 %v163, %v171
      %v176 = vsub.f32 %v164, %v172
      %v177 = vmul.f32 %v89, %v173
      %v178 = vmul.f32 %v90, %v174
      %v179 = vmul.f32 %v91, %v175
      %v180 = vmul.f32 %v92, %v176
      %v181 = vadd.f32 %v177, %v169
      %v182 = vadd.f32 %v178, %v170
      %v183 = vadd.f32 %v179, %v171
      %v184 = vadd.f32 %v180, %v172
      %v185 = vsub.f32 0.0, %v181
      %v186 = vsub.f32 0.0, %v182
      %v187 = vsub.f32 0.0, %v183
      %v188 = vsub.f32 0.0, %v184
      %v189 = vld [vmem:[#allocation7] sm:$0xff]
      %v190 = vmul.f32 %v154, %v89
      %v191 = vmul.f32 %v156, %v90
      %v192 = vmul.f32 %v158, %v91
      %v193 = vmul.f32 %v160, %v92
      %v194 = vadd.f32 %v190, %v191
      %v195 = vadd.f32 %v194, %v192
      %v196 = vadd.f32 %v195, %v193
      %v197 = vadd.f32 %v189, %v196
      %198 = vst [vmem:[#allocation7] sm:$0xff] %v197
      %s199 = scalar_lea.vmem [#allocation7], 8
      %v200 = vld [vmem:[%s199] sm:$0xff]
      %v201 = vadd.f32 %v154, %v156
      %v202 = vadd.f32 %v201, %v158
      %v203 = vadd.f32 %v202, %v160
      %v204 = vadd.f32 %v200, %v203
      %205 = vst [vmem:[%s199] sm:$0xff] %v204
      %s206 = scalar_lea.vmem [#allocation7], 16
      %v207 = vld [vmem:[%s206] sm:$0xff]
      %v208 = vadd.f32 %v89, %v90
      %v209 = vadd.f32 %v208, %v91
      %v210 = vadd.f32 %v209, %v92
      %v211 = vadd.f32 %v207, %v210
      %212 = vst [vmem:[%s206] sm:$0xff] %v211
      %s213 = scalar_lea.vmem [#allocation7], 24
      %v214 = vld [vmem:[%s213] sm:$0xff]
      %v215 = vadd.f32 %v185, %v186
      %v216 = vadd.f32 %v215, %v187
      %v217 = vadd.f32 %v216, %v188
      %v218 = vadd.f32 %v214, %v217
      %219 = vst [vmem:[%s213] sm:$0xff] %v218
    $region25: #{tpu_custom_call.1} parent=1 // pred_fallthru
      _
    %p220 = scmp.eq.s32.totalorder %s72, 0
    // Predicated region
    $region26: #{tpu_custom_call.1} parent=1 // pred_check
      %p221 = pneg %p220
    $region27: #{tpu_custom_call.1} parent=1 // pred_check_branch
      %223 = sbr.rel (%p221) target = $region29
    $region28: #{tpu_custom_call.1} parent=1 // pred_region
      %v224 = vld [vmem:[#allocation2] sm:$0xff]
      %v225 = vld [vmem:[#allocation2 + $0x8] sm:$0xff]
      %v226 = vld [vmem:[#allocation2 + $0x10] sm:$0xff]
      %v227 = vld [vmem:[#allocation2 + $0x18] sm:$0xff]
      %v228 = vld [vmem:[#allocation5] sm:$0xff]
      %v229 = vld [vmem:[#allocation5 + $0x8] sm:$0xff]
      %v230 = vld [vmem:[#allocation5 + $0x10] sm:$0xff]
      %v231 = vld [vmem:[#allocation5 + $0x18] sm:$0xff]
      %v232 = vlaneseq
      %v233 = vshrl.u32 %v232, 7
      %v234 = vadd.s32 %v233, 8
      %v235 = vadd.s32 %v233, 16
      %v236 = vadd.s32 %v233, 24
      %v237 = vlaneseq
      %v238 = vand.u32 %v237, 127
      %v239 = vmul.u32 %v233, 128
      %v240 = vmul.u32 %v234, 128
      %v241 = vmul.u32 %v235, 128
      %v242 = vmul.u32 %v236, 128
      %v243 = vadd.s32 %v239, %v238
      %v244 = vadd.s32 %v240, %v238
      %v245 = vadd.s32 %v241, %v238
      %v246 = vadd.s32 %v242, %v238
      %vm247 = vcmp.lt.s32.totalorder %v243, 2048
      %vm248 = vcmp.lt.s32.totalorder %v244, 2048
      %vm249 = vcmp.lt.s32.totalorder %v245, 2048
      %vm250 = vcmp.lt.s32.totalorder %v246, 2048
      %v251 = vsel %vm247, 1, 0
      %v252 = vsel %vm248, 1, 0
      %v253 = vsel %vm249, 1, 0
      %v254 = vsel %vm250, 1, 0
      %v255 = vcvt.s32.f32 %v251
      %v256 = vcvt.s32.f32 %v252
      %v257 = vcvt.s32.f32 %v253
      %v258 = vcvt.s32.f32 %v254
      %v259 = vsel %vm247, %v224, 0.0
      %v260 = vsel %vm248, %v225, 0.0
      %v261 = vsel %vm249, %v226, 0.0
      %v262 = vsel %vm250, %v227, 0.0
      %v263 = vsel %vm247, %v228, 0.0
      %v264 = vsel %vm248, %v229, 0.0
      %v265 = vsel %vm249, %v230, 0.0
      %v266 = vsel %vm250, %v231, 0.0
      %v267 = vand.u32 2147483647, %v259
      %v268 = vand.u32 2147483647, %v260
      %v269 = vand.u32 2147483647, %v261
      %v270 = vand.u32 2147483647, %v262
      %v271 = vsub.f32 0.0, %v267
      %v272 = vsub.f32 0.0, %v268
      %v273 = vsub.f32 0.0, %v269
      %v274 = vsub.f32 0.0, %v270
      %v275 = vmul.f32 %v271, 1.442695
      %v276 = vpow.pop %v275
      %v277 = vmul.f32 %v272, 1.442695
      %v278 = vpow.pop %v277
      %v279 = vmul.f32 %v273, 1.442695
      %v280 = vpow.pop %v279
      %v281 = vmul.f32 %v274, 1.442695
      %v282 = vpow.pop %v281
      %v283 = vmin.f32 %v259, 0.0
      %v284 = vmin.f32 %v260, 0.0
      %v285 = vmin.f32 %v261, 0.0
      %v286 = vmin.f32 %v262, 0.0
      %v287 = vadd.f32 %v276, 1.0
      %v288 = vlog2.pop %v287
      %v289 = vmul.f32 %v288, 0.6931472
      %v290 = vmul.f32 -0.5, %v276
      %v291 = vadd.f32 %v290, 1.0
      %v292 = vmul.f32 %v291, %v276
      %v293 = vand.u32 2147483647, %v276
      %vm294 = vcmp.lt.f32.partialorder %v293, 0.0004427343
      %v295 = vsel %vm294, %v292, %v289
      %v296 = vadd.f32 %v278, 1.0
      %v297 = vlog2.pop %v296
      %v298 = vmul.f32 %v297, 0.6931472
      %v299 = vmul.f32 -0.5, %v278
      %v300 = vadd.f32 %v299, 1.0
      %v301 = vmul.f32 %v300, %v278
      %v302 = vand.u32 2147483647, %v278
      %vm303 = vcmp.lt.f32.partialorder %v302, 0.0004427343
      %v304 = vsel %vm303, %v301, %v298
      %v305 = vadd.f32 %v280, 1.0
      %v306 = vlog2.pop %v305
      %v307 = vmul.f32 %v306, 0.6931472
      %v308 = vmul.f32 -0.5, %v280
      %v309 = vadd.f32 %v308, 1.0
      %v310 = vmul.f32 %v309, %v280
      %v311 = vand.u32 2147483647, %v280
      %vm312 = vcmp.lt.f32.partialorder %v311, 0.0004427343
      %v313 = vsel %vm312, %v310, %v307
      %v314 = vadd.f32 %v282, 1.0
      %v315 = vlog2.pop %v314
      %v316 = vmul.f32 %v315, 0.6931472
      %v317 = vmul.f32 -0.5, %v282
      %v318 = vadd.f32 %v317, 1.0
      %v319 = vmul.f32 %v318, %v282
      %v320 = vand.u32 2147483647, %v282
      %vm321 = vcmp.lt.f32.partialorder %v320, 0.0004427343
      %v322 = vsel %vm321, %v319, %v316
      %v323 = vsub.f32 %v283, %v295
      %v324 = vsub.f32 %v284, %v304
      %v325 = vsub.f32 %v285, %v313
      %v326 = vsub.f32 %v286, %v322
      %v327 = vmul.f32 %v323, 1.442695
      %v328 = vpow.pop %v327
      %v329 = vmul.f32 %v324, 1.442695
      %v330 = vpow.pop %v329
      %v331 = vmul.f32 %v325, 1.442695
      %v332 = vpow.pop %v331
      %v333 = vmul.f32 %v326, 1.442695
      %v334 = vpow.pop %v333
      %v335 = vmax.f32 %v323, -100.0
      %v336 = vmax.f32 %v324, -100.0
      %v337 = vmax.f32 %v325, -100.0
      %v338 = vmax.f32 %v326, -100.0
      %v339 = vsub.f32 %v323, %v259
      %v340 = vsub.f32 %v324, %v260
      %v341 = vsub.f32 %v325, %v261
      %v342 = vsub.f32 %v326, %v262
      %v343 = vmax.f32 %v339, -100.0
      %v344 = vmax.f32 %v340, -100.0
      %v345 = vmax.f32 %v341, -100.0
      %v346 = vmax.f32 %v342, -100.0
      %v347 = vsub.f32 %v335, %v343
      %v348 = vsub.f32 %v336, %v344
      %v349 = vsub.f32 %v337, %v345
      %v350 = vsub.f32 %v338, %v346
      %v351 = vmul.f32 %v263, %v347
      %v352 = vmul.f32 %v264, %v348
      %v353 = vmul.f32 %v265, %v349
      %v354 = vmul.f32 %v266, %v350
      %v355 = vadd.f32 %v351, %v343
      %v356 = vadd.f32 %v352, %v344
      %v357 = vadd.f32 %v353, %v345
      %v358 = vadd.f32 %v354, %v346
      %v359 = vsub.f32 0.0, %v355
      %v360 = vsub.f32 0.0, %v356
      %v361 = vsub.f32 0.0, %v357
      %v362 = vsub.f32 0.0, %v358
      %v363 = vmul.f32 %v328, %v255
      %v364 = vmul.f32 %v330, %v256
      %v365 = vmul.f32 %v332, %v257
      %v366 = vmul.f32 %v334, %v258
      %v367 = vmul.f32 %v359, %v255
      %v368 = vmul.f32 %v360, %v256
      %v369 = vmul.f32 %v361, %v257
      %v370 = vmul.f32 %v362, %v258
      %v371 = vld [vmem:[#allocation7] sm:$0xff]
      %v372 = vmul.f32 %v363, %v263
      %v373 = vmul.f32 %v364, %v264
      %v374 = vmul.f32 %v365, %v265
      %v375 = vmul.f32 %v366, %v266
      %v376 = vadd.f32 %v372, %v373
      %v377 = vadd.f32 %v376, %v374
      %v378 = vadd.f32 %v377, %v375
      %v379 = vadd.f32 %v371, %v378
      %380 = vst [vmem:[#allocation7] sm:$0xff] %v379
      %s381 = scalar_lea.vmem [#allocation7], 8
      %v382 = vld [vmem:[%s381] sm:$0xff]
      %v383 = vadd.f32 %v363, %v364
      %v384 = vadd.f32 %v383, %v365
      %v385 = vadd.f32 %v384, %v366
      %v386 = vadd.f32 %v382, %v385
      %387 = vst [vmem:[%s381] sm:$0xff] %v386
      %s388 = scalar_lea.vmem [#allocation7], 16
      %v389 = vld [vmem:[%s388] sm:$0xff]
      %v390 = vadd.f32 %v263, %v264
      %v391 = vadd.f32 %v390, %v265
      %v392 = vadd.f32 %v391, %v266
      %v393 = vadd.f32 %v389, %v392
      %394 = vst [vmem:[%s388] sm:$0xff] %v393
      %s395 = scalar_lea.vmem [#allocation7], 24
      %v396 = vld [vmem:[%s395] sm:$0xff]
      %v397 = vadd.f32 %v367, %v368
      %v398 = vadd.f32 %v397, %v369
      %v399 = vadd.f32 %v398, %v370
      %v400 = vadd.f32 %v396, %v399
      %401 = vst [vmem:[%s395] sm:$0xff] %v400
    $region29: #{tpu_custom_call.1} parent=1 // pred_fallthru
      _
    // Predicated region
    $region30: #{tpu_custom_call.1} parent=1 // pred_check
      _
    $region31: #{tpu_custom_call.1} parent=1 // pred_check_branch
      %403 = sbr.rel (0) target = $region33
    $region32: #{tpu_custom_call.1} parent=1 // pred_region
      %s405 = ssub.s32 512, 512
      %406 = vsyncadd [#allocation4], %s405
      %s407 = sshll.u32 [#allocation7], 4
      %s408 = int_to_ptr.vmem [resolvable:$true] %s407
      %413 = dma.vmem_to_hbm [thread:$0]  %s408, 512, %s2, [#allocation4], 128, 128, 8
    $region33: #{tpu_custom_call.1} parent=1 // pred_fallthru
      _
    // Predicated region
    $region34: #{tpu_custom_call.1} parent=1 // pred_check
      _
    $region35: #{tpu_custom_call.1} parent=1 // pred_check_branch
      %415 = sbr.rel (0) target = $region37
    $region36: #{tpu_custom_call.1} parent=1 // pred_region
      %416 = dma.done [#allocation4], 512
    $region37: #{tpu_custom_call.1} parent=1 // pred_fallthru
      _
    %417 = vsyncpa [#allocation3], 1
    %418 = vsyncpa [#allocation6], 1
    %419 = vsyncpa [#allocation4], 1

</llo_original>
